<compile_context>
chip_gen: v5e
topology: v5e:2x2
jax: 0.10.0
libtpu: 0.0.40
codegen_flags: <defaults>
</compile_context>

<pallas_src>
import functools

import jax
import jax.numpy as jnp
from jax.experimental import pallas as pl
from jax.experimental.pallas import tpu as pltpu


def _contrastive_loss_kernel(x0_ref, x1_ref, y_ref, out_ref, acc_ref, *,
                             margin, inv_two_b, tile_rows, valid_rows, ragged):
    # Zero the resident accumulator on the first grid step.
    @pl.when(pl.program_id(0) == 0)
    def _():
        acc_ref[...] = jnp.zeros_like(acc_ref)

    x0 = x0_ref[...].astype(jnp.float32)          # (TB, D)
    x1 = x1_ref[...].astype(jnp.float32)          # (TB, D)
    y = y_ref[...].astype(jnp.float32)            # (TB, 1)

    diff = x0 - x1                                              # (TB, D)
    dist_sq = jnp.sum(diff * diff, axis=1, keepdims=True)       # (TB, 1)
    dist = jnp.sqrt(dist_sq)                                    # (TB, 1)
    clamped = jnp.maximum(margin - dist, 0.0)                   # (TB, 1)

    # Per-row loss.
    loss_rows = y * dist_sq + (1.0 - y) * (clamped * clamped)   # (TB, 1)

    # Mask rows of the (possibly partial) last tile instead of padding the
    # inputs in the wrapper.  Static flag: no cost when B % TB == 0.
    if ragged:
        base = pl.program_id(0) * tile_rows
        row_ids = base + jax.lax.broadcasted_iota(jnp.int32, loss_rows.shape, 0)
        loss_rows = jnp.where(row_ids < valid_rows, loss_rows, 0.0)

    # Reduce this tile's rows into the resident accumulator.
    acc_ref[...] += jnp.sum(loss_rows, axis=0, keepdims=True)   # (1, 1)

    # Write the scalar result once, at the final grid step, with a single
    # precomputed scale (0.5 / B) instead of two divides per step.
    @pl.when(pl.program_id(0) == pl.num_programs(0) - 1)
    def _():
        out_ref[...] = acc_ref[...] * inv_two_b


def _choose_tile_rows(B, D, itemsize):
    """Pick TB so 2 inputs x 2 pipeline buffers x (TB, D_lane_padded) ~ 10 MiB."""
    d_pad = ((D + 127) // 128) * 128          # lane-padded footprint in VMEM
    budget_bytes = 10 * 1024 * 1024
    tb = budget_bytes // (4 * d_pad * max(int(itemsize), 1))
    tb = max(8, min(4096, (tb // 8) * 8))     # multiple of 8 sublanes, capped
    if tb >= B:
        return B                              # single full-batch block
    return tb


def contrastive_loss(x0, x1, y, margin=1.0, block_rows=None):
    """JAX/Pallas equivalent of ContrastiveLoss(margin).forward(x0, x1, y).

    x0, x1: (B, D) float arrays (any float dtype; upcast to f32 in-kernel)
    y:      (B,)   float array (1.0 = similar pair, 0.0 = dissimilar)
    Returns a scalar f32 loss.
    """
    B, D = x0.shape
    y2d = y.reshape(B, 1)

    if block_rows is None:
        TB = _choose_tile_rows(B, D, jnp.dtype(x0.dtype).itemsize)
    else:
        TB = B if block_rows >= B else max(8, (int(block_rows) // 8) * 8)

    num_tiles = pl.cdiv(B, TB)
    ragged = (num_tiles * TB != B)

    kernel = functools.partial(
        _contrastive_loss_kernel,
        margin=float(margin),
        inv_two_b=0.5 / float(B),
        tile_rows=TB,
        valid_rows=B,
        ragged=ragged,
    )

    out = pl.pallas_call(
        kernel,
        out_shape=jax.ShapeDtypeStruct((1, 1), jnp.float32),
        grid_spec=pltpu.PrefetchScalarGridSpec(
            num_scalar_prefetch=0,
            grid=(num_tiles,),
            in_specs=[
                pl.BlockSpec((TB, D), lambda i: (i, 0)),
                pl.BlockSpec((TB, D), lambda i: (i, 0)),
                pl.BlockSpec((TB, 1), lambda i: (i, 0)),
            ],
            out_specs=pl.BlockSpec((1, 1), lambda i: (0, 0)),
            scratch_shapes=[pltpu.VMEM((1, 1), jnp.float32)],
        ),
        compiler_params=pltpu.CompilerParams(
            dimension_semantics=("arbitrary",),        # reduction axis
            vmem_limit_bytes=32 * 1024 * 1024,          # safe on v5e/v6e/v7x
        ),
    )(x0, x1, y2d)
    return out[0, 0]


def _reference_loss(x0, x1, y, margin=1.0):
    x0 = x0.astype(jnp.float32)
    x1 = x1.astype(jnp.float32)
    y = y.astype(jnp.float32)
    diff = x0 - x1
    dist_sq = jnp.sum(diff ** 2, axis=1)
    dist = jnp.sqrt(dist_sq)
    clamped = jnp.maximum(margin - dist, 0.0)
    loss = y * dist_sq + (1.0 - y) * clamped ** 2
    return jnp.sum(loss) / 2.0 / x0.shape[0]


if __name__ == "__main__":
    key = jax.random.PRNGKey(0)
    k0, k1, k2 = jax.random.split(key, 3)

    # Test 1: small single-block case (matches the module's typical use).
    B, D = 8, 32
    x0 = jax.random.normal(k0, (B, D), dtype=jnp.float32)
    x1 = jax.random.normal(k1, (B, D), dtype=jnp.float32)
    y = jax.random.bernoulli(k2, 0.5, (B,)).astype(jnp.float32)

    loss = jax.block_until_ready(contrastive_loss(x0, x1, y, margin=1.0))
    ref = _reference_loss(x0, x1, y, margin=1.0)
    assert jnp.allclose(loss, ref, atol=1e-5, rtol=1e-5), (loss, ref)

    # Test 2: multi-tile with exact tiling (accumulator across grid steps).
    B2, D2 = 24, 128
    k3, k4, k5 = jax.random.split(k2, 3)
    x0b = jax.random.normal(k3, (B2, D2), dtype=jnp.float32)
    x1b = jax.random.normal(k4, (B2, D2), dtype=jnp.float32)
    yb = jax.random.bernoulli(k5, 0.5, (B2,)).astype(jnp.float32)
    loss2 = jax.block_until_ready(contrastive_loss(x0b, x1b, yb, margin=0.5,
                                                   block_rows=8))
    ref2 = _reference_loss(x0b, x1b, yb, margin=0.5)
    assert jnp.allclose(loss2, ref2, atol=1e-5, rtol=1e-5), (loss2, ref2)

    # Test 3: multi-tile with a ragged last tile (in-kernel row masking).
    B3, D3 = 20, 128
    x0c = x0b[:B3]
    x1c = x1b[:B3]
    yc = yb[:B3]
    loss3 = jax.block_until_ready(contrastive_loss(x0c, x1c, yc, margin=1.0,
                                                   block_rows=8))
    ref3 = _reference_loss(x0c, x1c, yc, margin=1.0)
    assert jnp.allclose(loss3, ref3, atol=1e-5, rtol=1e-5), (loss3, ref3)

    print("KERNEL_OK")
</pallas_src>

<mosaic_0001>
module attributes {stable_mosaic.version = 11 : i64} {
  func.func @_contrastive_loss_kernel(%arg0: i32, %arg1: memref<8x32xf32, #tpu.memory_space<vmem>>, %arg2: memref<8x32xf32, #tpu.memory_space<vmem>>, %arg3: memref<8x1xf32, #tpu.memory_space<vmem>>, %arg4: memref<1x1xf32, #tpu.memory_space<vmem>>, %arg5: memref<1x1xf32, #tpu.memory_space<vmem>>) attributes {dimension_semantics = [#tpu.dimension_semantics<arbitrary>], iteration_bounds = array<i64: 1>, scalar_prefetch = 0 : i64, scratch_operands = 1 : i64, tpu.core_type = #tpu.core_type<tc>, window_params = [{transform_indices = @transform_0, window_bounds = array<i64: 8, 32>}, {transform_indices = @transform_1, window_bounds = array<i64: 8, 32>}, {transform_indices = @transform_2, window_bounds = array<i64: 8, 1>}, {pipeline_mode = #tpu.pipeline_mode<synchronous>, transform_indices = @transform_3, window_bounds = array<i64: 1, 1>}]} {
    %c0_i32 = arith.constant 0 : i32
    %0 = arith.cmpi eq, %arg0, %c0_i32 : i32
    %1 = arith.extui %0 : i1 to i32
    %c0_i32_0 = arith.constant 0 : i32
    %2 = arith.cmpi ne, %1, %c0_i32_0 : i32
    scf.if %2 {
      %cst_16 = arith.constant 0.000000e+00 : f32
      %29 = vector.broadcast %cst_16 : f32 to vector<1x1xf32>
      %c0_17 = arith.constant 0 : index
      %c0_18 = arith.constant 0 : index
      %30 = vector.load %arg5[%c0_17, %c0_18] : memref<1x1xf32, #tpu.memory_space<vmem>>, vector<1x1xf32>
      tpu.vector_store %arg5[%c0_17, %c0_18], %29 {strides = array<i32>} : memref<1x1xf32, #tpu.memory_space<vmem>>, vector<1x1xf32>,
    } else {
    }
    %c0 = arith.constant 0 : index
    %c0_1 = arith.constant 0 : index
    %3 = vector.load %arg1[%c0, %c0_1] : memref<8x32xf32, #tpu.memory_space<vmem>>, vector<8x32xf32>
    %c0_2 = arith.constant 0 : index
    %c0_3 = arith.constant 0 : index
    %4 = vector.load %arg2[%c0_2, %c0_3] : memref<8x32xf32, #tpu.memory_space<vmem>>, vector<8x32xf32>
    %c0_4 = arith.constant 0 : index
    %c0_5 = arith.constant 0 : index
    %5 = vector.load %arg3[%c0_4, %c0_5] : memref<8x1xf32, #tpu.memory_space<vmem>>, vector<8x1xf32>
    %6 = arith.subf %3, %4 : vector<8x32xf32>
    %7 = arith.mulf %6, %6 : vector<8x32xf32>
    %cst = arith.constant dense<0.000000e+00> : vector<8xf32>
    %8 = vector.multi_reduction <add>, %7, %cst [1] : vector<8x32xf32> to vector<8xf32>
    %9 = vector.shape_cast %8 : vector<8xf32> to vector<8x1xf32>
    %10 = math.sqrt %9 : vector<8x1xf32>
    %cst_6 = arith.constant 1.000000e+00 : f32
    %11 = vector.broadcast %cst_6 : f32 to vector<8x1xf32>
    %12 = arith.subf %11, %10 : vector<8x1xf32>
    %cst_7 = arith.constant 0.000000e+00 : f32
    %13 = vector.broadcast %cst_7 : f32 to vector<8x1xf32>
    %14 = arith.maximumf %12, %13 : vector<8x1xf32>
    %15 = arith.mulf %5, %9 : vector<8x1xf32>
    %cst_8 = arith.constant 1.000000e+00 : f32
    %16 = vector.broadcast %cst_8 : f32 to vector<8x1xf32>
    %17 = arith.subf %16, %5 : vector<8x1xf32>
    %18 = arith.mulf %14, %14 : vector<8x1xf32>
    %19 = arith.mulf %17, %18 : vector<8x1xf32>
    %20 = arith.addf %15, %19 : vector<8x1xf32>
    %c0_9 = arith.constant 0 : index
    %c0_10 = arith.constant 0 : index
    %21 = vector.load %arg5[%c0_9, %c0_10] : memref<1x1xf32, #tpu.memory_space<vmem>>, vector<1x1xf32>
    %cst_11 = arith.constant dense<0.000000e+00> : vector<1xf32>
    %22 = vector.multi_reduction <add>, %20, %cst_11 [0] : vector<8x1xf32> to vector<1xf32>
    %23 = vector.shape_cast %22 : vector<1xf32> to vector<1x1xf32>
    %24 = arith.addf %21, %23 : vector<1x1xf32>
    %c0_12 = arith.constant 0 : index
    %c0_13 = arith.constant 0 : index
    %25 = vector.load %arg5[%c0_12, %c0_13] : memref<1x1xf32, #tpu.memory_space<vmem>>, vector<1x1xf32>
    tpu.vector_store %arg5[%c0_12, %c0_13], %24 {strides = array<i32>} : memref<1x1xf32, #tpu.memory_space<vmem>>, vector<1x1xf32>,
    %c0_i32_14 = arith.constant 0 : i32
    %26 = arith.cmpi eq, %arg0, %c0_i32_14 : i32
    %27 = arith.extui %26 : i1 to i32
    %c0_i32_15 = arith.constant 0 : i32
    %28 = arith.cmpi ne, %27, %c0_i32_15 : i32
    scf.if %28 {
      %c0_16 = arith.constant 0 : index
      %c0_17 = arith.constant 0 : index
      %29 = vector.load %arg5[%c0_16, %c0_17] : memref<1x1xf32, #tpu.memory_space<vmem>>, vector<1x1xf32>
      %cst_18 = arith.constant 6.250000e-02 : f32
      %30 = vector.broadcast %cst_18 : f32 to vector<1x1xf32>
      %31 = arith.mulf %29, %30 : vector<1x1xf32>
      %c0_19 = arith.constant 0 : index
      %c0_20 = arith.constant 0 : index
      %32 = vector.load %arg4[%c0_19, %c0_20] : memref<1x1xf32, #tpu.memory_space<vmem>>, vector<1x1xf32>
      tpu.vector_store %arg4[%c0_19, %c0_20], %31 {strides = array<i32>} : memref<1x1xf32, #tpu.memory_space<vmem>>, vector<1x1xf32>,
    } else {
    }
    return
  }
  func.func @transform_0(%arg0: i32) -> (i32, i32) {
    %c0_i32 = arith.constant 0 : i32
    %c0_i32_0 = arith.constant 0 : i32
    return %arg0, %c0_i32 : i32, i32
  }
  func.func @transform_1(%arg0: i32) -> (i32, i32) {
    %c0_i32 = arith.constant 0 : i32
    %c0_i32_0 = arith.constant 0 : i32
    return %arg0, %c0_i32 : i32, i32
  }
  func.func @transform_2(%arg0: i32) -> (i32, i32) {
    %c0_i32 = arith.constant 0 : i32
    %c0_i32_0 = arith.constant 0 : i32
    return %arg0, %c0_i32 : i32, i32
  }
  func.func @transform_3(%arg0: i32) -> (i32, i32) {
    %c0_i32 = arith.constant 0 : i32
    %c0_i32_0 = arith.constant 0 : i32
    %c0_i32_1 = arith.constant 0 : i32
    return %c0_i32, %c0_i32_0 : i32, i32
  }
}

</mosaic_0001>

<llo_original>
// kernel: tpu_custom_call.1
$region0: #{tpu_custom_call.1}
  #allocation0 [shape = 'u32[]', space=smem, size = 0x4, offset = 0x4, fixed_abs, tag = 'smem constant byte address 0x4 - core index']
  #allocation1 [shape = 'u32[72,128]{1,0:T(1,128)}', space=vmem, size = 0x9000, scoped, tag = 'internal scratch']
  #allocation2 [shape = 'f32[1,1]{1,0:T(1,128)}', space=vmem, size = 0x200, scoped, tag = 'scratch operand']
  %s0 = inlined_call_operand.vmem [shape: f32[8,32], index: 0, kind: input, shape index: {}]
  %s1 = inlined_call_operand.hbm [shape: f32[8,32], index: 1, kind: input, shape index: {}]
  %s2 = inlined_call_operand.vmem [shape: f32[8,1], index: 2, kind: input, shape index: {}]
  %s3 = inlined_call_operand.hbm [shape: f32[1,1], index: 3, kind: output, shape index: {}]
  %s4 = sld [smem:[#allocation0]]
  $region34: #{tpu_custom_call.1} parent=0
    _
  %s6 = ssub.s32 1, %s4
  %s7 = scalar_select 0, %s6, %s4
  $region1: #{tpu_custom_call.1} parent=0
    #allocation3 [shape = 'u8[4096]{0}', space=vmem, size = 0x1000, scoped, tag = 'input window, operand 1, single buffered']
    #allocation4 [shape = 's32[1]{0}', space=sflag, size = 0x4, scoped, tag = 'scoped memory for tpu_custom_call.1']
    #allocation5 [shape = 's32[1]{0}', space=sflag, size = 0x4, scoped, tag = 'scoped memory for tpu_custom_call.1']
    #allocation6 [shape = 'u8[512]{0}', space=vmem, size = 0x400, scoped, tag = 'output window, operand 0, single buffered']
    %8 = vsyncpa [#allocation4], 0
    %9 = vsyncpa [#allocation5], 0
    // Predicated region
    $region2: #{tpu_custom_call.1} parent=1 // pred_check
      _
    $region3: #{tpu_custom_call.1} parent=1 // pred_check_branch
      %11 = sbr.rel (0) target = $region5
    $region4: #{tpu_custom_call.1} parent=1 // pred_region
      _
    $region5: #{tpu_custom_call.1} parent=1 // pred_fallthru
      _
    // Predicated region
    $region6: #{tpu_custom_call.1} parent=1 // pred_check
      _
    $region7: #{tpu_custom_call.1} parent=1 // pred_check_branch
      %13 = sbr.rel (0) target = $region9
    $region8: #{tpu_custom_call.1} parent=1 // pred_region
      %15 = vsyncadd [#allocation4], 0
      %s17 = sshll.u32 %s1, 4
      %s18 = int_to_ptr.hbm [resolvable:$true] %s17
      %s19 = sshll.u32 [#allocation3], 4
      %s20 = int_to_ptr.vmem [resolvable:$true] %s19
      %22 = dma.hbm_to_vmem [thread:$0]  %s18, 128, %s20, [#allocation4]
    $region9: #{tpu_custom_call.1} parent=1 // pred_fallthru
      _
    // Predicated region
    $region10: #{tpu_custom_call.1} parent=1 // pred_check
      _
    $region11: #{tpu_custom_call.1} parent=1 // pred_check_branch
      %24 = sbr.rel (0) target = $region13
    $region12: #{tpu_custom_call.1} parent=1 // pred_region
      _
    $region13: #{tpu_custom_call.1} parent=1 // pred_fallthru
      _
    // Predicated region
    $region14: #{tpu_custom_call.1} parent=1 // pred_check
      _
    $region15: #{tpu_custom_call.1} parent=1 // pred_check_branch
      %26 = sbr.rel (0) target = $region17
    $region16: #{tpu_custom_call.1} parent=1 // pred_region
      %28 = dma.done [#allocation4], 128
    $region17: #{tpu_custom_call.1} parent=1 // pred_fallthru
      _
    %p29 = scmp.eq.s32.totalorder 0, 0
    // Predicated region
    $region18: #{tpu_custom_call.1} parent=1 // pred_check
      %p30 = pneg %p29
    $region19: #{tpu_custom_call.1} parent=1 // pred_check_branch
      %32 = sbr.rel (%p30) target = $region21
    $region20: #{tpu_custom_call.1} parent=1 // pred_region
      %vm33 = vcmask 0
      %34 = vst.msk [vmem:[#allocation2] sm:$0x1] %vm33, 0.0
    $region21: #{tpu_custom_call.1} parent=1 // pred_fallthru
      _
    %v35 = vld [vmem:[%s0] sm:$0xff]
    %v36 = vld [vmem:[#allocation3] sm:$0xff]
    %v37 = vld [vmem:[%s2] sm:$0xff]
    %v38 = vsub.f32 %v35, %v36
    %v39 = vmul.f32 %v38, %v38
    %vm40 = vcmask 261120
    %v41 = vsel %vm40, %v39, 0.0
    %42 = vadd.xlane.f32.xlu0 %v41
    %v43 = vpop.xlane.xlu0 %42
    %v44 = vrsqrt.pop %v43
    %v45 = vmul.f32 %v44, %v43
    %v46 = vmul.f32 %v45, %v44
    %v47 = vmul.f32 0.5, %v46
    %v48 = vsub.f32 1.5, %v47
    %v49 = vmul.f32 %v44, %v48
    %v50 = vmul.f32 %v43, %v49
    %vm51 = vcmp.eq.f32.partialorder %v43, inf
    %v52 = vsel %vm51, %v43, %v50
    %vm53 = vcmp.eq.f32.partialorder %v43, 0.0
    %v54 = vand.u32 %v43, 2147483648
    %v55 = vsel %vm53, %v54, %v52
    %v56 = vsub.f32 1.0, %v55
    %v57 = vmax.f32 %v56, 0.0
    %v58 = vmul.f32 %v37, %v43
    %v59 = vsub.f32 1.0, %v37
    %v60 = vmul.f32 %v57, %v57
    %v61 = vmul.f32 %v59, %v60
    %v62 = vadd.f32 %v58, %v61
    %v63 = vld [vmem:[#allocation2] sm:$0x1]
    %vm64 = vcmask 7168
    %v65 = vsel %vm64, %v62, 0.0
    %v66 = vrot.slane %v65, 4
    %v67 = vadd.f32 %v65, %v66
    %v68 = vrot.slane %v67, 2
    %v69 = vadd.f32 %v67, %v68
    %v70 = vrot.slane %v69, 1
    %v71 = vadd.f32 %v69, %v70
    %v72 = vadd.f32 %v63, %v71
    %vm73 = vcmask 0
    %74 = vst.msk [vmem:[#allocation2] sm:$0x1] %vm73, %v72
    // Predicated region
    $region22: #{tpu_custom_call.1} parent=1 // pred_check
      %p75 = pneg %p29
    $region23: #{tpu_custom_call.1} parent=1 // pred_check_branch
      %77 = sbr.rel (%p75) target = $region25
    $region24: #{tpu_custom_call.1} parent=1 // pred_region
      %v78 = vld [vmem:[#allocation2] sm:$0x1]
      %v79 = vmul.f32 %v78, 0.0625
      %80 = vst.msk [vmem:[#allocation6] sm:$0x1] %vm73, %v79
    $region25: #{tpu_custom_call.1} parent=1 // pred_fallthru
      _
    // Predicated region
    $region26: #{tpu_custom_call.1} parent=1 // pred_check
      _
    $region27: #{tpu_custom_call.1} parent=1 // pred_check_branch
      %82 = sbr.rel (0) target = $region29
    $region28: #{tpu_custom_call.1} parent=1 // pred_region
      %84 = vsyncadd [#allocation5], 0
      %s86 = sshll.u32 [#allocation6], 4
      %s87 = int_to_ptr.vmem [resolvable:$true] %s86
      %s88 = sshll.u32 %s3, 4
      %s89 = int_to_ptr.hbm [resolvable:$true] %s88
      %91 = dma.vmem_to_hbm [thread:$0]  %s87, 16, %s89, [#allocation5]
    $region29: #{tpu_custom_call.1} parent=1 // pred_fallthru
      _
    // Predicated region
    $region30: #{tpu_custom_call.1} parent=1 // pred_check
      _
    $region31: #{tpu_custom_call.1} parent=1 // pred_check_branch
      %93 = sbr.rel (0) target = $region33
    $region32: #{tpu_custom_call.1} parent=1 // pred_region
      %95 = dma.done [#allocation5], 16
    $region33: #{tpu_custom_call.1} parent=1 // pred_fallthru
      _
    %96 = vsyncpa [#allocation4], 1
    %97 = vsyncpa [#allocation5], 1

</llo_original>
